<compile_context>
chip_gen: v7x
topology: tpu7x:2x2x1
jax: 0.10.0
libtpu: 0.0.40
codegen_flags: <defaults>
</compile_context>

<pallas_src>
import jax
import jax.numpy as jnp
from jax.experimental import pallas as pl
from jax.experimental.pallas import tpu as pltpu

EMB_DIM = 32      # embedding_dim (== hidden_dim so decoder can reuse encoder hidden)
HID_DIM = 32      # hidden_dim
VOCAB = 16        # vocab_size
TAGSET = 10       # tagset_size
MAX_LENGTH = 8    # MAX_LENGTH
SOS_TOKEN = 0

LANE = 128        # TPU lane width; the whole slab is one 128-lane-wide block

# ---- single parameter slab layout: (SLAB_ROWS, LANE), all row starts % 8 == 0
R_ENC_EMB = 0                       # (VOCAB, H)         lanes 0:H
R_ENC_W = 16                        # (2H, 128) fused enc GRU weight [r|z|n_i|n_h]
R_ENC_B = R_ENC_W + 2 * HID_DIM     # 80: (1, 128) fused enc GRU bias
R_DEC_W = 88                        # (2H, 128) fused dec GRU weight
R_DEC_B = R_DEC_W + 2 * HID_DIM     # 152: (1, 128) fused dec GRU bias
R_ATTN_WH = 160                     # (H, L)   attn_w hidden half, lanes 0:L
R_ATTN_CB = R_ATTN_WH + HID_DIM     # 192: (1, L) emb_SOS@attn_w[:H] + attn_b
R_COMB_WH = 200                     # (H, H)   comb_w attn-applied half
R_COMB_CB = R_COMB_WH + HID_DIM     # 232: (1, H) emb_SOS@comb_w[:H] + comb_b
R_OUT_W = 240                       # (H, T)   lanes 0:T (rest zero -> lane-dense logits)
R_OUT_B = R_OUT_W + HID_DIM         # 272: (1, T)
SLAB_ROWS = 280


def _gru_fused(xh, h, w, b):
    """One nn.GRU cell step (PyTorch gate order r, z, n) as a single MXU push.

    xh: (B, 2H) = cat(x, h); h: (B, H);
    w:  (2H, 128) with lane blocks [r | z | n_i | n_h] (rows 0:H = input
        weights, rows H:2H = hidden weights; n_i has zero hidden rows, n_h
        has zero input rows);
    b:  (1, 128) = [b_ir+b_hr | b_iz+b_hz | b_in | b_hn].
    """
    H = h.shape[1]
    g = jnp.dot(xh, w, preferred_element_type=jnp.float32) + b          # (B, 128)
    r = jax.nn.sigmoid(g[:, 0:H])
    z = jax.nn.sigmoid(g[:, H:2 * H])
    n = jnp.tanh(g[:, 2 * H:3 * H] + r * g[:, 3 * H:4 * H])
    return (1.0 - z) * n + z * h


def nmt_kernel(tok_ref,            # (BM, 1) int32 source token ids
               h0_ref,             # (BM, H) encoder initial hidden
               w_ref,              # (SLAB_ROWS, 128) packed weight slab (resident)
               scores_ref):        # out: (BM, 128) lane-dense log-probs (first TAGSET valid)
    H, V, T, L = HID_DIM, VOCAB, TAGSET, MAX_LENGTH
    B = tok_ref.shape[0]

    # ------------- EncoderRNN: one-hot embedding gather + fused GRU step -----
    onehot = (jax.lax.broadcasted_iota(jnp.int32, (B, V), 1)
              == tok_ref[...]).astype(jnp.float32)                       # (B, V)
    x_enc = jnp.dot(onehot, w_ref[R_ENC_EMB:R_ENC_EMB + V, 0:H],
                    preferred_element_type=jnp.float32)                  # (B, H)
    h0 = h0_ref[...]                                                     # (B, H)
    h_enc = _gru_fused(jnp.concatenate([x_enc, h0], axis=1), h0,
                       w_ref[R_ENC_W:R_ENC_W + 2 * H, :],
                       w_ref[R_ENC_B:R_ENC_B + 1, :])                    # (B, H)
    # single-layer / single-step GRU: encoder_outputs[0] == h_enc

    # ------------- AttnDecoderRNN (input = constant SOS -> folded biases) ----
    logits_a = (jnp.dot(h_enc, w_ref[R_ATTN_WH:R_ATTN_WH + H, 0:L],
                        preferred_element_type=jnp.float32)
                + w_ref[R_ATTN_CB:R_ATTN_CB + 1, 0:L])                   # (B, L)
    m_a = jnp.max(logits_a, axis=1, keepdims=True)
    p_a = jnp.exp(logits_a - m_a)
    attn_weights = p_a / jnp.sum(p_a, axis=1, keepdims=True)             # exact softmax

    # bmm(attn_weights, encoder_outputs): only slot 0 of the buffer is filled
    attn_applied = attn_weights[:, 0:1] * h_enc                          # (B, H)

    # attn_combine(cat(emb_SOS, attn_applied)) -> relu   (emb half folded)
    x_dec = jnp.maximum(
        jnp.dot(attn_applied, w_ref[R_COMB_WH:R_COMB_WH + H, 0:H],
                preferred_element_type=jnp.float32)
        + w_ref[R_COMB_CB:R_COMB_CB + 1, 0:H], 0.0)                      # (B, H)

    # decoder GRU step (hidden carried over from the encoder)
    h_dec = _gru_fused(jnp.concatenate([x_dec, h_enc], axis=1), h_enc,
                       w_ref[R_DEC_W:R_DEC_W + 2 * H, :],
                       w_ref[R_DEC_B:R_DEC_B + 1, :])                    # (B, H)

    # out linear + log_softmax, computed and stored lane-dense over 128 lanes
    logits = (jnp.dot(h_dec, w_ref[R_OUT_W:R_OUT_W + H, :],
                      preferred_element_type=jnp.float32)
              + w_ref[R_OUT_B:R_OUT_B + 1, :])                           # (B, 128)
    valid = jax.lax.broadcasted_iota(jnp.int32, (B, LANE), 1) < T
    masked = jnp.where(valid, logits, -1e30)
    m_o = jnp.max(masked, axis=1, keepdims=True)
    lse = jnp.log(jnp.sum(jnp.where(valid, jnp.exp(masked - m_o), 0.0),
                          axis=1, keepdims=True)) + m_o
    scores_ref[...] = logits - lse        # lanes >= TAGSET sliced off by the wrapper


def init_params(key):
    E, H, V, T, L = EMB_DIM, HID_DIM, VOCAB, TAGSET, MAX_LENGTH
    ks = iter(jax.random.split(key, 16))

    def unif(k, shape, fan_in):
        b = 1.0 / (fan_in ** 0.5)
        return jax.random.uniform(k, shape, jnp.float32, -b, b)

    p = {}
    p["enc_emb"] = jax.random.normal(next(ks), (V, E), jnp.float32)
    p["enc_wi"] = unif(next(ks), (E, 3 * E), E)     # GRU weight_ih (pre-transposed, r|z|n)
    p["enc_wh"] = unif(next(ks), (E, 3 * E), E)     # GRU weight_hh (pre-transposed, r|z|n)
    p["enc_bi"] = unif(next(ks), (1, 3 * E), E)
    p["enc_bh"] = unif(next(ks), (1, 3 * E), E)
    p["dec_emb"] = jax.random.normal(next(ks), (T, H), jnp.float32)
    p["attn_w"] = unif(next(ks), (2 * H, L), 2 * H)
    p["attn_b"] = unif(next(ks), (1, L), 2 * H)
    p["comb_w"] = unif(next(ks), (2 * H, H), 2 * H)
    p["comb_b"] = unif(next(ks), (1, H), 2 * H)
    p["dec_wi"] = unif(next(ks), (H, 3 * H), H)
    p["dec_wh"] = unif(next(ks), (H, 3 * H), H)
    p["dec_bi"] = unif(next(ks), (1, 3 * H), H)
    p["dec_bh"] = unif(next(ks), (1, 3 * H), H)
    p["out_w"] = unif(next(ks), (H, T), H)
    p["out_b"] = unif(next(ks), (1, T), H)
    return p


def pack_params(p):
    """Pack all parameters into ONE lane-aligned f32 slab (done once, host-side)."""
    H, V, T, L = HID_DIM, VOCAB, TAGSET, MAX_LENGTH
    assert 4 * H == LANE, "fused GRU gate layout assumes 4*H == 128 lanes"

    def fused_gru(wi, wh, bi, bh):
        # (2H, 128) with lane blocks [r | z | n_i | n_h]; rows 0:H input, H:2H hidden.
        w = jnp.zeros((2 * H, LANE), jnp.float32)
        w = w.at[0:H, 0:H].set(wi[:, 0:H])                    # r, input half
        w = w.at[H:2 * H, 0:H].set(wh[:, 0:H])                # r, hidden half
        w = w.at[0:H, H:2 * H].set(wi[:, H:2 * H])            # z, input half
        w = w.at[H:2 * H, H:2 * H].set(wh[:, H:2 * H])        # z, hidden half
        w = w.at[0:H, 2 * H:3 * H].set(wi[:, 2 * H:3 * H])    # n_i (input only)
        w = w.at[H:2 * H, 3 * H:4 * H].set(wh[:, 2 * H:3 * H])  # n_h (hidden only)
        b = jnp.zeros((1, LANE), jnp.float32)
        b = b.at[:, 0:H].set(bi[:, 0:H] + bh[:, 0:H])
        b = b.at[:, H:2 * H].set(bi[:, H:2 * H] + bh[:, H:2 * H])
        b = b.at[:, 2 * H:3 * H].set(bi[:, 2 * H:3 * H])
        b = b.at[:, 3 * H:4 * H].set(bh[:, 2 * H:3 * H])
        return w, b

    enc_w, enc_b = fused_gru(p["enc_wi"], p["enc_wh"], p["enc_bi"], p["enc_bh"])
    dec_w, dec_b = fused_gru(p["dec_wi"], p["dec_wh"], p["dec_bi"], p["dec_bh"])

    # constant-fold the SOS decoder embedding through the two linears' emb-halves
    emb_sos = p["dec_emb"][SOS_TOKEN][None, :]                           # (1, H)
    attn_const = emb_sos @ p["attn_w"][:H] + p["attn_b"]                 # (1, L)
    comb_const = emb_sos @ p["comb_w"][:H] + p["comb_b"]                 # (1, H)

    slab = jnp.zeros((SLAB_ROWS, LANE), jnp.float32)
    slab = slab.at[R_ENC_EMB:R_ENC_EMB + V, 0:H].set(p["enc_emb"])
    slab = slab.at[R_ENC_W:R_ENC_W + 2 * H, :].set(enc_w)
    slab = slab.at[R_ENC_B:R_ENC_B + 1, :].set(enc_b)
    slab = slab.at[R_DEC_W:R_DEC_W + 2 * H, :].set(dec_w)
    slab = slab.at[R_DEC_B:R_DEC_B + 1, :].set(dec_b)
    slab = slab.at[R_ATTN_WH:R_ATTN_WH + H, 0:L].set(p["attn_w"][H:2 * H])
    slab = slab.at[R_ATTN_CB:R_ATTN_CB + 1, 0:L].set(attn_const)
    slab = slab.at[R_COMB_WH:R_COMB_WH + H, 0:H].set(p["comb_w"][H:2 * H])
    slab = slab.at[R_COMB_CB:R_COMB_CB + 1, 0:H].set(comb_const)
    slab = slab.at[R_OUT_W:R_OUT_W + H, 0:T].set(p["out_w"])
    slab = slab.at[R_OUT_B:R_OUT_B + 1, 0:T].set(p["out_b"])
    return slab


def _round_up(x, m):
    return (x + m - 1) // m * m


@jax.jit
def nmt_forward(slab, sentence, encoder_hidden):
    """sentence: (B,) int32 source token ids (one per sentence, as in the module);
    encoder_hidden: (B, 1, HID_DIM) f32.  Returns (B, TAGSET) log-probabilities."""
    tok = sentence.reshape(-1).astype(jnp.int32)
    B = tok.shape[0]
    h0 = encoder_hidden.reshape(B, HID_DIM).astype(jnp.float32)

    # batch tile: multiple of the f32 sublane tile (8), capped at 128 MXU rows;
    # the grid over batch tiles is "parallel" so v7x's 2 TensorCores share it.
    BM = min(128, _round_up(B, 8))
    B_pad = _round_up(B, BM)
    tok_p = jnp.full((B_pad, 1), -1, jnp.int32).at[:B, 0].set(tok)       # -1 -> zero emb
    h0_p = jnp.zeros((B_pad, HID_DIM), jnp.float32).at[:B].set(h0)

    scores = pl.pallas_call(
        nmt_kernel,
        out_shape=jax.ShapeDtypeStruct((B_pad, LANE), jnp.float32),
        grid=(B_pad // BM,),
        in_specs=[pl.BlockSpec((BM, 1), lambda i: (i, 0)),
                  pl.BlockSpec((BM, HID_DIM), lambda i: (i, 0)),
                  pl.BlockSpec((SLAB_ROWS, LANE), lambda i: (0, 0))],    # resident slab
        out_specs=pl.BlockSpec((BM, LANE), lambda i: (i, 0)),
        compiler_params=pltpu.CompilerParams(
            dimension_semantics=("parallel",)),
    )(tok_p, h0_p, slab)
    return scores[:B, :TAGSET]


def nmt_reference(params, sentence, encoder_hidden):
    """Pure-JAX reference with the explicit (MAX_LENGTH, H) encoder_outputs buffer."""
    p = params

    def gru(x, h, wi, wh, bi, bh, hd):
        gi = x @ wi + bi
        gh = h @ wh + bh
        r = jax.nn.sigmoid(gi[:, :hd] + gh[:, :hd])
        z = jax.nn.sigmoid(gi[:, hd:2 * hd] + gh[:, hd:2 * hd])
        n = jnp.tanh(gi[:, 2 * hd:] + r * gh[:, 2 * hd:])
        return (1.0 - z) * n + z * h

    def single(tok, h0_row):
        h0 = h0_row.reshape(1, EMB_DIM)
        x = p["enc_emb"][tok][None, :]
        h_enc = gru(x, h0, p["enc_wi"], p["enc_wh"], p["enc_bi"], p["enc_bh"], EMB_DIM)
        enc_outs = jnp.zeros((MAX_LENGTH, HID_DIM), jnp.float32).at[0].set(h_enc[0])

        emb = p["dec_emb"][SOS_TOKEN][None, :]
        cat1 = jnp.concatenate([emb, h_enc], axis=1)
        attn_w = jax.nn.softmax(cat1 @ p["attn_w"] + p["attn_b"], axis=1)
        applied = attn_w @ enc_outs
        cat2 = jnp.concatenate([emb, applied], axis=1)
        x2 = jax.nn.relu(cat2 @ p["comb_w"] + p["comb_b"])
        h_dec = gru(x2, h_enc, p["dec_wi"], p["dec_wh"], p["dec_bi"], p["dec_bh"], HID_DIM)
        return jax.nn.log_softmax(h_dec @ p["out_w"] + p["out_b"], axis=1)[0]

    return jax.vmap(single)(sentence.astype(jnp.int32),
                            encoder_hidden.reshape(-1, EMB_DIM))


if __name__ == "__main__":
    key = jax.random.PRNGKey(0)
    kp, kt, kh = jax.random.split(key, 3)
    params = init_params(kp)
    slab = pack_params(params)                       # host-side packing, done once

    B = 8                                            # batch of independent sentences
    sentence = jax.random.randint(kt, (B,), 0, VOCAB, dtype=jnp.int32)
    encoder_hidden = 0.5 * jax.random.normal(kh, (B, 1, EMB_DIM), jnp.float32)

    scores = nmt_forward(slab, sentence, encoder_hidden)
    scores = jax.block_until_ready(scores)
    assert scores.shape == (B, TAGSET)

    ref = nmt_reference(params, sentence, encoder_hidden)
    # tolerance covers MXU default-precision (bf16-pass) f32 matmuls on both sides;
    # the approximate reciprocal has been removed.
    assert jnp.allclose(scores, ref, atol=5e-3, rtol=5e-3), (scores, ref)

    print("KERNEL_OK")
</pallas_src>

<mosaic_0001>
module attributes {stable_mosaic.version = 11 : i64} {
  func.func @nmt_kernel(%arg0: i32, %arg1: memref<8x1xi32, #tpu.memory_space<vmem>>, %arg2: memref<8x32xf32, #tpu.memory_space<vmem>>, %arg3: memref<280x128xf32, #tpu.memory_space<vmem>>, %arg4: memref<8x128xf32, #tpu.memory_space<vmem>>) attributes {dimension_semantics = [#tpu.dimension_semantics<parallel>], iteration_bounds = array<i64: 1>, scalar_prefetch = 0 : i64, scratch_operands = 0 : i64, tpu.core_type = #tpu.core_type<tc>, window_params = [{transform_indices = @transform_0, window_bounds = array<i64: 8, 1>}, {transform_indices = @transform_1, window_bounds = array<i64: 8, 32>}, {pipeline_mode = #tpu.pipeline_mode<synchronous>, transform_indices = @transform_2, window_bounds = array<i64: 280, 128>}, {transform_indices = @transform_3, window_bounds = array<i64: 8, 128>}]} {
    %0 = tpu.iota {dimensions = array<i32: 1>} : vector<8x16xi32>
    %c0 = arith.constant 0 : index
    %c0_0 = arith.constant 0 : index
    %1 = vector.load %arg1[%c0, %c0_0] : memref<8x1xi32, #tpu.memory_space<vmem>>, vector<8x1xi32>
    %2 = vector.broadcast %1 : vector<8x1xi32> to vector<8x16xi32>
    %3 = arith.cmpi eq, %0, %2 : vector<8x16xi32>
    %4 = arith.extui %3 : vector<8x16xi1> to vector<8x16xi32>
    %5 = arith.sitofp %4 : vector<8x16xi32> to vector<8x16xf32>
    %c0_1 = arith.constant 0 : index
    %c0_2 = arith.constant 0 : index
    %6 = vector.load %arg3[%c0_1, %c0_2] : memref<280x128xf32, #tpu.memory_space<vmem>>, vector<16x32xf32>
    %cst = arith.constant dense<0.000000e+00> : vector<8x32xf32>
    %7 = tpu.matmul %5, %6, %cst {dimension_numbers = #tpu.dot_dimension_numbers<[1], [0], [0], [1], [0, 0, 1, 1], [], []>} : vector<8x16xf32>, vector<16x32xf32>, vector<8x32xf32> -> vector<8x32xf32>
    %c0_3 = arith.constant 0 : index
    %c0_4 = arith.constant 0 : index
    %8 = vector.load %arg2[%c0_3, %c0_4] : memref<8x32xf32, #tpu.memory_space<vmem>>, vector<8x32xf32>
    %9 = tpu.concatenate %7, %8 in 1 : vector<8x32xf32>, vector<8x32xf32> -> vector<8x64xf32>
    %c16 = arith.constant 16 : index
    %c0_5 = arith.constant 0 : index
    %10 = vector.load %arg3[%c16, %c0_5] : memref<280x128xf32, #tpu.memory_space<vmem>>, vector<64x128xf32>
    %c80 = arith.constant 80 : index
    %c0_6 = arith.constant 0 : index
    %11 = vector.load %arg3[%c80, %c0_6] : memref<280x128xf32, #tpu.memory_space<vmem>>, vector<1x128xf32>
    %cst_7 = arith.constant dense<0.000000e+00> : vector<8x128xf32>
    %12 = tpu.matmul %9, %10, %cst_7 {dimension_numbers = #tpu.dot_dimension_numbers<[1], [0], [0], [1], [0, 0, 1, 1], [], []>} : vector<8x64xf32>, vector<64x128xf32>, vector<8x128xf32> -> vector<8x128xf32>
    %13 = vector.broadcast %11 : vector<1x128xf32> to vector<8x128xf32>
    %14 = arith.addf %12, %13 : vector<8x128xf32>
    %15 = vector.extract_strided_slice %14 {offsets = [0, 0], sizes = [8, 32], strides = [1, 1]} : vector<8x128xf32> to vector<8x32xf32>
    %16 = arith.negf %15 : vector<8x32xf32>
    %17 = math.exp %16 : vector<8x32xf32>
    %cst_8 = arith.constant 1.000000e+00 : f32
    %18 = vector.broadcast %cst_8 : f32 to vector<8x32xf32>
    %19 = arith.addf %18, %17 : vector<8x32xf32>
    %20 = arith.divf %18, %19 : vector<8x32xf32>
    %21 = vector.extract_strided_slice %14 {offsets = [0, 32], sizes = [8, 32], strides = [1, 1]} : vector<8x128xf32> to vector<8x32xf32>
    %22 = arith.negf %21 : vector<8x32xf32>
    %23 = math.exp %22 : vector<8x32xf32>
    %cst_9 = arith.constant 1.000000e+00 : f32
    %24 = vector.broadcast %cst_9 : f32 to vector<8x32xf32>
    %25 = arith.addf %24, %23 : vector<8x32xf32>
    %26 = arith.divf %24, %25 : vector<8x32xf32>
    %27 = vector.extract_strided_slice %14 {offsets = [0, 64], sizes = [8, 32], strides = [1, 1]} : vector<8x128xf32> to vector<8x32xf32>
    %28 = vector.extract_strided_slice %14 {offsets = [0, 96], sizes = [8, 32], strides = [1, 1]} : vector<8x128xf32> to vector<8x32xf32>
    %29 = arith.mulf %20, %28 : vector<8x32xf32>
    %30 = arith.addf %27, %29 : vector<8x32xf32>
    %31 = math.tanh %30 : vector<8x32xf32>
    %cst_10 = arith.constant 1.000000e+00 : f32
    %32 = vector.broadcast %cst_10 : f32 to vector<8x32xf32>
    %33 = arith.subf %32, %26 : vector<8x32xf32>
    %34 = arith.mulf %33, %31 : vector<8x32xf32>
    %35 = arith.mulf %26, %8 : vector<8x32xf32>
    %36 = arith.addf %34, %35 : vector<8x32xf32>
    %c160 = arith.constant 160 : index
    %c0_11 = arith.constant 0 : index
    %37 = vector.load %arg3[%c160, %c0_11] : memref<280x128xf32, #tpu.memory_space<vmem>>, vector<32x8xf32>
    %cst_12 = arith.constant dense<0.000000e+00> : vector<8x8xf32>
    %38 = tpu.matmul %36, %37, %cst_12 {dimension_numbers = #tpu.dot_dimension_numbers<[1], [0], [0], [1], [0, 0, 1, 1], [], []>} : vector<8x32xf32>, vector<32x8xf32>, vector<8x8xf32> -> vector<8x8xf32>
    %c192 = arith.constant 192 : index
    %c0_13 = arith.constant 0 : index
    %39 = vector.load %arg3[%c192, %c0_13] : memref<280x128xf32, #tpu.memory_space<vmem>>, vector<1x8xf32>
    %40 = vector.broadcast %39 : vector<1x8xf32> to vector<8x8xf32>
    %41 = arith.addf %38, %40 : vector<8x8xf32>
    %cst_14 = arith.constant dense<0xFF800000> : vector<8xf32>
    %42 = vector.multi_reduction <maximumf>, %41, %cst_14 [1] : vector<8x8xf32> to vector<8xf32>
    %43 = vector.shape_cast %42 : vector<8xf32> to vector<8x1xf32>
    %44 = vector.broadcast %43 : vector<8x1xf32> to vector<8x8xf32>
    %45 = arith.subf %41, %44 : vector<8x8xf32>
    %46 = math.exp %45 : vector<8x8xf32>
    %cst_15 = arith.constant dense<0.000000e+00> : vector<8xf32>
    %47 = vector.multi_reduction <add>, %46, %cst_15 [1] : vector<8x8xf32> to vector<8xf32>
    %48 = vector.shape_cast %47 : vector<8xf32> to vector<8x1xf32>
    %49 = vector.broadcast %48 : vector<8x1xf32> to vector<8x8xf32>
    %50 = arith.divf %46, %49 : vector<8x8xf32>
    %51 = vector.extract_strided_slice %50 {offsets = [0, 0], sizes = [8, 1], strides = [1, 1]} : vector<8x8xf32> to vector<8x1xf32>
    %52 = vector.broadcast %51 : vector<8x1xf32> to vector<8x32xf32>
    %53 = arith.mulf %52, %36 : vector<8x32xf32>
    %c200 = arith.constant 200 : index
    %c0_16 = arith.constant 0 : index
    %54 = vector.load %arg3[%c200, %c0_16] : memref<280x128xf32, #tpu.memory_space<vmem>>, vector<32x32xf32>
    %cst_17 = arith.constant dense<0.000000e+00> : vector<8x32xf32>
    %55 = tpu.matmul %53, %54, %cst_17 {dimension_numbers = #tpu.dot_dimension_numbers<[1], [0], [0], [1], [0, 0, 1, 1], [], []>} : vector<8x32xf32>, vector<32x32xf32>, vector<8x32xf32> -> vector<8x32xf32>
    %c232 = arith.constant 232 : index
    %c0_18 = arith.constant 0 : index
    %56 = vector.load %arg3[%c232, %c0_18] : memref<280x128xf32, #tpu.memory_space<vmem>>, vector<1x32xf32>
    %57 = vector.broadcast %56 : vector<1x32xf32> to vector<8x32xf32>
    %58 = arith.addf %55, %57 : vector<8x32xf32>
    %cst_19 = arith.constant 0.000000e+00 : f32
    %59 = vector.broadcast %cst_19 : f32 to vector<8x32xf32>
    %60 = arith.maximumf %58, %59 : vector<8x32xf32>
    %61 = tpu.concatenate %60, %36 in 1 : vector<8x32xf32>, vector<8x32xf32> -> vector<8x64xf32>
    %c88 = arith.constant 88 : index
    %c0_20 = arith.constant 0 : index
    %62 = vector.load %arg3[%c88, %c0_20] : memref<280x128xf32, #tpu.memory_space<vmem>>, vector<64x128xf32>
    %c152 = arith.constant 152 : index
    %c0_21 = arith.constant 0 : index
    %63 = vector.load %arg3[%c152, %c0_21] : memref<280x128xf32, #tpu.memory_space<vmem>>, vector<1x128xf32>
    %cst_22 = arith.constant dense<0.000000e+00> : vector<8x128xf32>
    %64 = tpu.matmul %61, %62, %cst_22 {dimension_numbers = #tpu.dot_dimension_numbers<[1], [0], [0], [1], [0, 0, 1, 1], [], []>} : vector<8x64xf32>, vector<64x128xf32>, vector<8x128xf32> -> vector<8x128xf32>
    %65 = vector.broadcast %63 : vector<1x128xf32> to vector<8x128xf32>
    %66 = arith.addf %64, %65 : vector<8x128xf32>
    %67 = vector.extract_strided_slice %66 {offsets = [0, 0], sizes = [8, 32], strides = [1, 1]} : vector<8x128xf32> to vector<8x32xf32>
    %68 = arith.negf %67 : vector<8x32xf32>
    %69 = math.exp %68 : vector<8x32xf32>
    %cst_23 = arith.constant 1.000000e+00 : f32
    %70 = vector.broadcast %cst_23 : f32 to vector<8x32xf32>
    %71 = arith.addf %70, %69 : vector<8x32xf32>
    %72 = arith.divf %70, %71 : vector<8x32xf32>
    %73 = vector.extract_strided_slice %66 {offsets = [0, 32], sizes = [8, 32], strides = [1, 1]} : vector<8x128xf32> to vector<8x32xf32>
    %74 = arith.negf %73 : vector<8x32xf32>
    %75 = math.exp %74 : vector<8x32xf32>
    %cst_24 = arith.constant 1.000000e+00 : f32
    %76 = vector.broadcast %cst_24 : f32 to vector<8x32xf32>
    %77 = arith.addf %76, %75 : vector<8x32xf32>
    %78 = arith.divf %76, %77 : vector<8x32xf32>
    %79 = vector.extract_strided_slice %66 {offsets = [0, 64], sizes = [8, 32], strides = [1, 1]} : vector<8x128xf32> to vector<8x32xf32>
    %80 = vector.extract_strided_slice %66 {offsets = [0, 96], sizes = [8, 32], strides = [1, 1]} : vector<8x128xf32> to vector<8x32xf32>
    %81 = arith.mulf %72, %80 : vector<8x32xf32>
    %82 = arith.addf %79, %81 : vector<8x32xf32>
    %83 = math.tanh %82 : vector<8x32xf32>
    %cst_25 = arith.constant 1.000000e+00 : f32
    %84 = vector.broadcast %cst_25 : f32 to vector<8x32xf32>
    %85 = arith.subf %84, %78 : vector<8x32xf32>
    %86 = arith.mulf %85, %83 : vector<8x32xf32>
    %87 = arith.mulf %78, %36 : vector<8x32xf32>
    %88 = arith.addf %86, %87 : vector<8x32xf32>
    %c240 = arith.constant 240 : index
    %c0_26 = arith.constant 0 : index
    %89 = vector.load %arg3[%c240, %c0_26] : memref<280x128xf32, #tpu.memory_space<vmem>>, vector<32x128xf32>
    %cst_27 = arith.constant dense<0.000000e+00> : vector<8x128xf32>
    %90 = tpu.matmul %88, %89, %cst_27 {dimension_numbers = #tpu.dot_dimension_numbers<[1], [0], [0], [1], [0, 0, 1, 1], [], []>} : vector<8x32xf32>, vector<32x128xf32>, vector<8x128xf32> -> vector<8x128xf32>
    %c272 = arith.constant 272 : index
    %c0_28 = arith.constant 0 : index
    %91 = vector.load %arg3[%c272, %c0_28] : memref<280x128xf32, #tpu.memory_space<vmem>>, vector<1x128xf32>
    %92 = vector.broadcast %91 : vector<1x128xf32> to vector<8x128xf32>
    %93 = arith.addf %90, %92 : vector<8x128xf32>
    %94 = tpu.iota {dimensions = array<i32: 1>} : vector<8x128xi32>
    %c10_i32 = arith.constant 10 : i32
    %95 = vector.broadcast %c10_i32 : i32 to vector<8x128xi32>
    %96 = arith.cmpi slt, %94, %95 : vector<8x128xi32>
    %cst_29 = arith.constant -1.000000e+30 : f32
    %97 = vector.broadcast %cst_29 : f32 to vector<8x128xf32>
    %98 = arith.select %96, %93, %97 : vector<8x128xi1>, vector<8x128xf32>
    %cst_30 = arith.constant dense<0xFF800000> : vector<8xf32>
    %99 = vector.multi_reduction <maximumf>, %98, %cst_30 [1] : vector<8x128xf32> to vector<8xf32>
    %100 = vector.shape_cast %99 : vector<8xf32> to vector<8x1xf32>
    %101 = vector.broadcast %100 : vector<8x1xf32> to vector<8x128xf32>
    %102 = arith.subf %98, %101 : vector<8x128xf32>
    %103 = math.exp %102 : vector<8x128xf32>
    %cst_31 = arith.constant 0.000000e+00 : f32
    %104 = vector.broadcast %cst_31 : f32 to vector<8x128xf32>
    %105 = arith.select %96, %103, %104 : vector<8x128xi1>, vector<8x128xf32>
    %cst_32 = arith.constant dense<0.000000e+00> : vector<8xf32>
    %106 = vector.multi_reduction <add>, %105, %cst_32 [1] : vector<8x128xf32> to vector<8xf32>
    %107 = vector.shape_cast %106 : vector<8xf32> to vector<8x1xf32>
    %108 = math.log %107 : vector<8x1xf32>
    %109 = arith.addf %108, %100 : vector<8x1xf32>
    %110 = vector.broadcast %109 : vector<8x1xf32> to vector<8x128xf32>
    %111 = arith.subf %93, %110 : vector<8x128xf32>
    %c0_33 = arith.constant 0 : index
    %c0_34 = arith.constant 0 : index
    %112 = vector.load %arg4[%c0_33, %c0_34] : memref<8x128xf32, #tpu.memory_space<vmem>>, vector<8x128xf32>
    tpu.vector_store %arg4[%c0_33, %c0_34], %111 {strides = array<i32>} : memref<8x128xf32, #tpu.memory_space<vmem>>, vector<8x128xf32>,
    return
  }
  func.func @transform_0(%arg0: i32) -> (i32, i32) {
    %c0_i32 = arith.constant 0 : i32
    %c0_i32_0 = arith.constant 0 : i32
    return %arg0, %c0_i32 : i32, i32
  }
  func.func @transform_1(%arg0: i32) -> (i32, i32) {
    %c0_i32 = arith.constant 0 : i32
    %c0_i32_0 = arith.constant 0 : i32
    return %arg0, %c0_i32 : i32, i32
  }
  func.func @transform_2(%arg0: i32) -> (i32, i32) {
    %c0_i32 = arith.constant 0 : i32
    %c0_i32_0 = arith.constant 0 : i32
    %c0_i32_1 = arith.constant 0 : i32
    return %c0_i32, %c0_i32_0 : i32, i32
  }
  func.func @transform_3(%arg0: i32) -> (i32, i32) {
    %c0_i32 = arith.constant 0 : i32
    %c0_i32_0 = arith.constant 0 : i32
    return %arg0, %c0_i32 : i32, i32
  }
}

</mosaic_0001>

<llo_original>
// kernel: nmt_forward.1
$region0: #{nmt_forward.1}
  #allocation0 [shape = 'u32[]', space=smem, size = 0x4, offset = 0x4, fixed_abs, tag = 'smem constant byte address 0x4 - core index']
  #allocation1 [shape = 'u32[144,128]{1,0:T(1,128)}', space=vmem, size = 0x12000, scoped, tag = 'internal scratch']
  %s0 = inlined_call_operand.vmem [shape: s32[8,1], index: 0, kind: input, shape index: {}]
  %s1 = inlined_call_operand.vmem [shape: f32[8,32], index: 1, kind: input, shape index: {}]
  %s2 = inlined_call_operand.hbm [shape: f32[280,128], index: 2, kind: input, shape index: {}]
  %s3 = inlined_call_operand.hbm [shape: f32[8,128], index: 3, kind: output, shape index: {}]
  %s4 = sld [smem:[#allocation0]]
  $region26: #{nmt_forward.1} parent=0
    _
  %s6 = ssub.s32 1, %s4
  %s7 = scalar_select 0, %s6, %s4
  $region1: #{nmt_forward.1} parent=0
    #allocation2 [shape = 'u8[143360]{0}', space=vmem, size = 0x23000, scoped, tag = 'input window, operand 2, single buffered']
    #allocation3 [shape = 's32[1]{0}', space=sflag, size = 0x4, scoped, tag = 'scoped memory for nmt_forward.1']
    #allocation4 [shape = 's32[1]{0}', space=sflag, size = 0x4, scoped, tag = 'scoped memory for nmt_forward.1']
    #allocation5 [shape = 'u8[4096]{0}', space=vmem, size = 0x1000, scoped, tag = 'output window, operand 0, single buffered']
    %8 = vsyncpa [#allocation3], 0
    %9 = vsyncpa [#allocation4], 0
    // Predicated region
    $region2: #{nmt_forward.1} parent=1 // pred_check
      _
    $region3: #{nmt_forward.1} parent=1 // pred_check_branch
      %11 = sbr.rel (0) target = $region5
    $region4: #{nmt_forward.1} parent=1 // pred_region
      _
    $region5: #{nmt_forward.1} parent=1 // pred_fallthru
      _
    // Predicated region
    $region6: #{nmt_forward.1} parent=1 // pred_check
      _
    $region7: #{nmt_forward.1} parent=1 // pred_check_branch
      %13 = sbr.rel (0) target = $region9
    $region8: #{nmt_forward.1} parent=1 // pred_region
      _
    $region9: #{nmt_forward.1} parent=1 // pred_fallthru
      _
    // Predicated region
    $region10: #{nmt_forward.1} parent=1 // pred_check
      _
    $region11: #{nmt_forward.1} parent=1 // pred_check_branch
      %15 = sbr.rel (0) target = $region13
    $region12: #{nmt_forward.1} parent=1 // pred_region
      %s17 = ssub.s32 4480, 4480
      %18 = vsyncadd [#allocation3], %s17
      %s19 = sshll.u32 [#allocation2], 4
      %s20 = int_to_ptr.vmem [resolvable:$true] %s19
      %25 = dma.hbm_to_vmem [thread:$0]  %s2, 4480, %s20, [#allocation3], 128, 128, 8
    $region13: #{nmt_forward.1} parent=1 // pred_fallthru
      _
    // Predicated region
    $region14: #{nmt_forward.1} parent=1 // pred_check
      _
    $region15: #{nmt_forward.1} parent=1 // pred_check_branch
      %27 = sbr.rel (0) target = $region17
    $region16: #{nmt_forward.1} parent=1 // pred_region
      %28 = dma.done [#allocation3], 4480
    $region17: #{nmt_forward.1} parent=1 // pred_fallthru
      _
    %v29 = vlaneseq
    %v30 = vand.u32 %v29, 127
    %v31 = vld [vmem:[%s0] sm:$0xff]
    %32 = vset.pattern.permute.xlu0 0
    %33 = vperm.xlu0 %32, %v31
    %v34 = vpop.permute.xlu0 %33
    %vm35 = vcmp.eq.s32.totalorder %v30, %v34
    %v36 = vsel %vm35, 1, 0
    %v37 = vcvt.s32.f32 %v36
    %v38 = vld [vmem:[#allocation2] sm:$0xff]
    %v39 = vld [vmem:[#allocation2 + $0x8] sm:$0xff]
    %vm40 = vcmask 130048
    %v42 = vsel %vm40, %v37, 0
    %44 = vmatprep.subr.mxu0 0.0
    %45 = vmatpush1.msra.mxu0 %v38
    %46 = vmatprep.subr.mxu0 0.0
    %47 = vmatpush1.msra.mxu0 %v39
    %48 = vmatprep.subr.mxu0 0.0
    %49 = vmatpush1.msra.mxu0 0.0
    %50 = vmatprep.subr.mxu0 0.0
    %51 = vmatpush1.msra.mxu0 0.0
    %52 = vmatprep.subr.mxu0 0.0
    %53 = vmatpush1.msra.mxu0 0.0
    %54 = vmatprep.subr.mxu0 0.0
    %55 = vmatpush1.msra.mxu0 0.0
    %56 = vmatprep.subr.mxu0 0.0
    %57 = vmatpush1.msra.mxu0 0.0
    %58 = vmatprep.subr.mxu0 0.0
    %59 = vmatpush1.msra.mxu0 0.0
    %60 = vmatprep.subr.mxu0 0.0
    %61 = vmatpush1.msra.mxu0 0.0
    %62 = vmatprep.subr.mxu0 0.0
    %63 = vmatpush1.msra.mxu0 0.0
    %64 = vmatprep.subr.mxu0 0.0
    %65 = vmatpush1.msra.mxu0 0.0
    %66 = vmatprep.subr.mxu0 0.0
    %67 = vmatpush1.msra.mxu0 0.0
    %68 = vmatprep.subr.mxu0 0.0
    %69 = vmatpush1.msra.mxu0 0.0
    %70 = vmatprep.subr.mxu0 0.0
    %71 = vmatpush1.msra.mxu0 0.0
    %72 = vmatprep.subr.mxu0 0.0
    %73 = vmatpush1.msra.mxu0 0.0
    %74 = vmatprep.subr.mxu0 0.0
    %75 = vmatpush1.msra.mxu0 0.0
    %76 = vmatprep.subr.mxu0 0.0
    %77 = vmatpush1.msra.mxu0 0.0
    %78 = vmatprep.subr.mxu0 0.0
    %79 = vmatpush1.msra.mxu0 0.0
    %80 = vmatprep.subr.mxu0 0.0
    %81 = vmatpush1.msra.mxu0 0.0
    %82 = vmatprep.subr.mxu0 0.0
    %83 = vmatpush1.msra.mxu0 0.0
    %84 = vmatprep.subr.mxu0 0.0
    %85 = vmatpush1.msra.mxu0 0.0
    %86 = vmatprep.subr.mxu0 0.0
    %87 = vmatpush1.msra.mxu0 0.0
    %88 = vmatprep.subr.mxu0 0.0
    %89 = vmatpush1.msra.mxu0 0.0
    %90 = vmatprep.subr.mxu0 0.0
    %91 = vmatpush1.msra.mxu0 0.0
    %92 = vmatprep.subr.mxu0 0.0
    %93 = vmatpush1.msra.mxu0 0.0
    %94 = vmatprep.subr.mxu0 0.0
    %95 = vmatpush1.msra.mxu0 0.0
    %96 = vmatprep.subr.mxu0 0.0
    %97 = vmatpush1.msra.mxu0 0.0
    %98 = vmatprep.subr.mxu0 0.0
    %99 = vmatpush1.msra.mxu0 0.0
    %100 = vmatprep.subr.mxu0 0.0
    %101 = vmatpush1.msra.mxu0 0.0
    %102 = vmatprep.subr.mxu0 0.0
    %103 = vmatpush1.msra.mxu0 0.0
    %104 = vmatprep.subr.mxu0 0.0
    %105 = vmatpush1.msra.mxu0 0.0
    %106 = vmatprep.subr.mxu0 0.0
    %107 = vmatpush1.msra.mxu0 0.0
    %108 = vmatprep.mubr.f32.mxu0 0.0
    %109 = vmatmul.mubr.f32.gmra.mrb[0].mxu0 %v42
    %v110 = vpop.f32.mrb[0].mxu0
    %v111 = vadd.f32 0.0, %v110
    %v112 = vpop.f32.mrb[0].mxu0
    %113 = vdwg.mxu0
    %v114 = vld [vmem:[%s1] sm:$0xff]
    %116 = vrot.lane.b32.xlu0 %v114, 32
    %v117 = vpop.permute.xlu0 %116
    %vm119 = vcmask 261120
    %v120 = vsel %vm119, %v111, %v117
    %v121 = vld [vmem:[#allocation2 + $0x10] sm:$0xff]
    %v122 = vld [vmem:[#allocation2 + $0x18] sm:$0xff]
    %v123 = vld [vmem:[#allocation2 + $0x20] sm:$0xff]
    %v124 = vld [vmem:[#allocation2 + $0x28] sm:$0xff]
    %v125 = vld [vmem:[#allocation2 + $0x30] sm:$0xff]
    %v126 = vld [vmem:[#allocation2 + $0x38] sm:$0xff]
    %v127 = vld [vmem:[#allocation2 + $0x40] sm:$0xff]
    %v128 = vld [vmem:[#allocation2 + $0x48] sm:$0xff]
    %v129 = vld [vmem:[#allocation2 + $0x50] sm:$0x1]
    %v130 = vlaneseq
    %v131 = vshrl.u32 %v130, 7
    %v132 = vsub.s32 0, %v131
    %v133 = vrot.slane %v129, %v132
    %vm134 = vcmask 523264
    %v136 = vsel %vm134, %v120, 0
    %138 = vmatprep.subr.mxu0 0.0
    %139 = vmatpush1.msra.mxu0 %v121
    %140 = vmatprep.subr.mxu0 0.0
    %141 = vmatpush1.msra.mxu0 %v122
    %142 = vmatprep.subr.mxu0 0.0
    %143 = vmatpush1.msra.mxu0 %v123
    %144 = vmatprep.subr.mxu0 0.0
    %145 = vmatpush1.msra.mxu0 %v124
    %146 = vmatprep.subr.mxu0 0.0
    %147 = vmatpush1.msra.mxu0 %v125
    %148 = vmatprep.subr.mxu0 0.0
    %149 = vmatpush1.msra.mxu0 %v126
    %150 = vmatprep.subr.mxu0 0.0
    %151 = vmatpush1.msra.mxu0 %v127
    %152 = vmatprep.subr.mxu0 0.0
    %153 = vmatpush1.msra.mxu0 %v128
    %154 = vmatprep.subr.mxu0 0.0
    %155 = vmatpush1.msra.mxu0 0.0
    %156 = vmatprep.subr.mxu0 0.0
    %157 = vmatpush1.msra.mxu0 0.0
    %158 = vmatprep.subr.mxu0 0.0
    %159 = vmatpush1.msra.mxu0 0.0
    %160 = vmatprep.subr.mxu0 0.0
    %161 = vmatpush1.msra.mxu0 0.0
    %162 = vmatprep.subr.mxu0 0.0
    %163 = vmatpush1.msra.mxu0 0.0
    %164 = vmatprep.subr.mxu0 0.0
    %165 = vmatpush1.msra.mxu0 0.0
    %166 = vmatprep.subr.mxu0 0.0
    %167 = vmatpush1.msra.mxu0 0.0
    %168 = vmatprep.subr.mxu0 0.0
    %169 = vmatpush1.msra.mxu0 0.0
    %170 = vmatprep.subr.mxu0 0.0
    %171 = vmatpush1.msra.mxu0 0.0
    %172 = vmatprep.subr.mxu0 0.0
    %173 = vmatpush1.msra.mxu0 0.0
    %174 = vmatprep.subr.mxu0 0.0
    %175 = vmatpush1.msra.mxu0 0.0
    %176 = vmatprep.subr.mxu0 0.0
    %177 = vmatpush1.msra.mxu0 0.0
    %178 = vmatprep.subr.mxu0 0.0
    %179 = vmatpush1.msra.mxu0 0.0
    %180 = vmatprep.subr.mxu0 0.0
    %181 = vmatpush1.msra.mxu0 0.0
    %182 = vmatprep.subr.mxu0 0.0
    %183 = vmatpush1.msra.mxu0 0.0
    %184 = vmatprep.subr.mxu0 0.0
    %185 = vmatpush1.msra.mxu0 0.0
    %186 = vmatprep.subr.mxu0 0.0
    %187 = vmatpush1.msra.mxu0 0.0
    %188 = vmatprep.subr.mxu0 0.0
    %189 = vmatpush1.msra.mxu0 0.0
    %190 = vmatprep.subr.mxu0 0.0
    %191 = vmatpush1.msra.mxu0 0.0
    %192 = vmatprep.subr.mxu0 0.0
    %193 = vmatpush1.msra.mxu0 0.0
    %194 = vmatprep.subr.mxu0 0.0
    %195 = vmatpush1.msra.mxu0 0.0
    %196 = vmatprep.subr.mxu0 0.0
    %197 = vmatpush1.msra.mxu0 0.0
    %198 = vmatprep.subr.mxu0 0.0
    %199 = vmatpush1.msra.mxu0 0.0
    %200 = vmatprep.subr.mxu0 0.0
    %201 = vmatpush1.msra.mxu0 0.0
    %202 = vmatprep.mubr.f32.mxu0 0.0
    %203 = vmatmul.mubr.f32.gmra.mrb[0].mxu0 %v136
    %v204 = vpop.f32.mrb[0].mxu0
    %v205 = vadd.f32 %v133, %v204
    %v206 = vpop.f32.mrb[0].mxu0
    %207 = vdwg.mxu0
    %v208 = vxor.u32 %v205, 2147483648
    %v209 = vmul.f32 %v208, 1.442695
    %v210 = vpow.pop %v209
    %v211 = vadd.f32 %v210, 1.0
    %v212 = vrcp.pop %v211
    %v213 = vmul.f32 1.0, %v212
    %215 = vrot.lane.b32.xlu0 %v205, 32
    %v216 = vpop.permute.xlu0 %215
    %v218 = vmul.f32 %v213, %v216
    %220 = vrot.lane.b32.xlu0 %v218, 64
    %v221 = vpop.permute.xlu0 %220
    %v223 = vadd.f32 %v205, %v221
    %v224 = vtanh.pop %v223
    %v225 = vsub.f32 1.0, %v213
    %227 = vrot.lane.b32.xlu0 %v224, 96
    %v228 = vpop.permute.xlu0 %227
    %v230 = vmul.f32 %v225, %v228
    %v231 = vmul.f32 %v213, %v117
    %v232 = vadd.f32 %v230, %v231
    %v233 = vld [vmem:[#allocation2 + $0xa0] sm:$0xff]
    %v234 = vld [vmem:[#allocation2 + $0xa8] sm:$0xff]
    %v235 = vld [vmem:[#allocation2 + $0xb0] sm:$0xff]
    %v236 = vld [vmem:[#allocation2 + $0xb8] sm:$0xff]
    %v237 = vld [vmem:[#allocation2 + $0xc0] sm:$0x1]
    %v238 = vlaneseq
    %v239 = vshrl.u32 %v238, 7
    %v240 = vsub.s32 0, %v239
    %v241 = vrot.slane %v237, %v240
    %243 = vrot.lane.b32.xlu0 %v232, 96
    %v244 = vpop.permute.xlu0 %243
    %v245 = vsel %vm119, %v244, 0
    %247 = vmatprep.subr.mxu0 0.0
    %248 = vmatpush1.msra.mxu0 %v233
    %249 = vmatprep.subr.mxu0 0.0
    %250 = vmatpush1.msra.mxu0 %v234
    %251 = vmatprep.subr.mxu0 0.0
    %252 = vmatpush1.msra.mxu0 %v235
    %253 = vmatprep.subr.mxu0 0.0
    %254 = vmatpush1.msra.mxu0 %v236
    %255 = vmatprep.subr.mxu0 0.0
    %256 = vmatpush1.msra.mxu0 0.0
    %257 = vmatprep.subr.mxu0 0.0
    %258 = vmatpush1.msra.mxu0 0.0
    %259 = vmatprep.subr.mxu0 0.0
    %260 = vmatpush1.msra.mxu0 0.0
    %261 = vmatprep.subr.mxu0 0.0
    %262 = vmatpush1.msra.mxu0 0.0
    %263 = vmatprep.subr.mxu0 0.0
    %264 = vmatpush1.msra.mxu0 0.0
    %265 = vmatprep.subr.mxu0 0.0
    %266 = vmatpush1.msra.mxu0 0.0
    %267 = vmatprep.subr.mxu0 0.0
    %268 = vmatpush1.msra.mxu0 0.0
    %269 = vmatprep.subr.mxu0 0.0
    %270 = vmatpush1.msra.mxu0 0.0
    %271 = vmatprep.subr.mxu0 0.0
    %272 = vmatpush1.msra.mxu0 0.0
    %273 = vmatprep.subr.mxu0 0.0
    %274 = vmatpush1.msra.mxu0 0.0
    %275 = vmatprep.subr.mxu0 0.0
    %276 = vmatpush1.msra.mxu0 0.0
    %277 = vmatprep.subr.mxu0 0.0
    %278 = vmatpush1.msra.mxu0 0.0
    %279 = vmatprep.subr.mxu0 0.0
    %280 = vmatpush1.msra.mxu0 0.0
    %281 = vmatprep.subr.mxu0 0.0
    %282 = vmatpush1.msra.mxu0 0.0
    %283 = vmatprep.subr.mxu0 0.0
    %284 = vmatpush1.msra.mxu0 0.0
    %285 = vmatprep.subr.mxu0 0.0
    %286 = vmatpush1.msra.mxu0 0.0
    %287 = vmatprep.subr.mxu0 0.0
    %288 = vmatpush1.msra.mxu0 0.0
    %289 = vmatprep.subr.mxu0 0.0
    %290 = vmatpush1.msra.mxu0 0.0
    %291 = vmatprep.subr.mxu0 0.0
    %292 = vmatpush1.msra.mxu0 0.0
    %293 = vmatprep.subr.mxu0 0.0
    %294 = vmatpush1.msra.mxu0 0.0
    %295 = vmatprep.subr.mxu0 0.0
    %296 = vmatpush1.msra.mxu0 0.0
    %297 = vmatprep.subr.mxu0 0.0
    %298 = vmatpush1.msra.mxu0 0.0
    %299 = vmatprep.subr.mxu0 0.0
    %300 = vmatpush1.msra.mxu0 0.0
    %301 = vmatprep.subr.mxu0 0.0
    %302 = vmatpush1.msra.mxu0 0.0
    %303 = vmatprep.subr.mxu0 0.0
    %304 = vmatpush1.msra.mxu0 0.0
    %305 = vmatprep.subr.mxu0 0.0
    %306 = vmatpush1.msra.mxu0 0.0
    %307 = vmatprep.subr.mxu0 0.0
    %308 = vmatpush1.msra.mxu0 0.0
    %309 = vmatprep.subr.mxu0 0.0
    %310 = vmatpush1.msra.mxu0 0.0
    %311 = vmatprep.mubr.f32.mxu0 0.0
    %312 = vmatmul.mubr.f32.gmra.mrb[0].mxu0 %v245
    %v313 = vpop.f32.mrb[0].mxu0
    %v314 = vadd.f32 %v241, %v313
    %v315 = vpop.f32.mrb[0].mxu0
    %316 = vdwg.mxu0
    %vm317 = vcmask 64512
    %v318 = vsel %vm317, %v314, -inf
    %319 = vmax.xlane.f32.xlu0 %v318
    %v320 = vpop.xlane.xlu0 %319
    %v321 = vsub.f32 %v314, %v320
    %v322 = vmul.f32 %v321, 1.442695
    %v323 = vpow.pop %v322
    %v324 = vsel %vm317, %v323, 0.0
    %325 = vadd.xlane.f32.xlu0 %v324
    %v326 = vpop.xlane.xlu0 %325
    %v327 = vrcp.pop %v326
    %v328 = vmul.f32 %v323, %v327
    %330 = vset.pattern.permute.xlu0 0
    %331 = vperm.xlu0 %330, %v328
    %v332 = vpop.permute.xlu0 %331
    %v334 = vmul.f32 %v332, %v232
    %v335 = vld [vmem:[#allocation2 + $0xc8] sm:$0xff]
    %v336 = vld [vmem:[#allocation2 + $0xd0] sm:$0xff]
    %v337 = vld [vmem:[#allocation2 + $0xd8] sm:$0xff]
    %v338 = vld [vmem:[#allocation2 + $0xe0] sm:$0xff]
    %v339 = vld [vmem:[#allocation2 + $0xe8] sm:$0x1]
    %v340 = vlaneseq
    %v341 = vshrl.u32 %v340, 7
    %v342 = vsub.s32 0, %v341
    %v343 = vrot.slane %v339, %v342
    %345 = vrot.lane.b32.xlu0 %v334, 96
    %v346 = vpop.permute.xlu0 %345
    %v347 = vsel %vm119, %v346, 0
    %349 = vmatprep.subr.mxu0 0.0
    %350 = vmatpush1.msra.mxu0 %v335
    %351 = vmatprep.subr.mxu0 0.0
    %352 = vmatpush1.msra.mxu0 %v336
    %353 = vmatprep.subr.mxu0 0.0
    %354 = vmatpush1.msra.mxu0 %v337
    %355 = vmatprep.subr.mxu0 0.0
    %356 = vmatpush1.msra.mxu0 %v338
    %357 = vmatprep.subr.mxu0 0.0
    %358 = vmatpush1.msra.mxu0 0.0
    %359 = vmatprep.subr.mxu0 0.0
    %360 = vmatpush1.msra.mxu0 0.0
    %361 = vmatprep.subr.mxu0 0.0
    %362 = vmatpush1.msra.mxu0 0.0
    %363 = vmatprep.subr.mxu0 0.0
    %364 = vmatpush1.msra.mxu0 0.0
    %365 = vmatprep.subr.mxu0 0.0
    %366 = vmatpush1.msra.mxu0 0.0
    %367 = vmatprep.subr.mxu0 0.0
    %368 = vmatpush1.msra.mxu0 0.0
    %369 = vmatprep.subr.mxu0 0.0
    %370 = vmatpush1.msra.mxu0 0.0
    %371 = vmatprep.subr.mxu0 0.0
    %372 = vmatpush1.msra.mxu0 0.0
    %373 = vmatprep.subr.mxu0 0.0
    %374 = vmatpush1.msra.mxu0 0.0
    %375 = vmatprep.subr.mxu0 0.0
    %376 = vmatpush1.msra.mxu0 0.0
    %377 = vmatprep.subr.mxu0 0.0
    %378 = vmatpush1.msra.mxu0 0.0
    %379 = vmatprep.subr.mxu0 0.0
    %380 = vmatpush1.msra.mxu0 0.0
    %381 = vmatprep.subr.mxu0 0.0
    %382 = vmatpush1.msra.mxu0 0.0
    %383 = vmatprep.subr.mxu0 0.0
    %384 = vmatpush1.msra.mxu0 0.0
    %385 = vmatprep.subr.mxu0 0.0
    %386 = vmatpush1.msra.mxu0 0.0
    %387 = vmatprep.subr.mxu0 0.0
    %388 = vmatpush1.msra.mxu0 0.0
    %389 = vmatprep.subr.mxu0 0.0
    %390 = vmatpush1.msra.mxu0 0.0
    %391 = vmatprep.subr.mxu0 0.0
    %392 = vmatpush1.msra.mxu0 0.0
    %393 = vmatprep.subr.mxu0 0.0
    %394 = vmatpush1.msra.mxu0 0.0
    %395 = vmatprep.subr.mxu0 0.0
    %396 = vmatpush1.msra.mxu0 0.0
    %397 = vmatprep.subr.mxu0 0.0
    %398 = vmatpush1.msra.mxu0 0.0
    %399 = vmatprep.subr.mxu0 0.0
    %400 = vmatpush1.msra.mxu0 0.0
    %401 = vmatprep.subr.mxu0 0.0
    %402 = vmatpush1.msra.mxu0 0.0
    %403 = vmatprep.subr.mxu0 0.0
    %404 = vmatpush1.msra.mxu0 0.0
    %405 = vmatprep.subr.mxu0 0.0
    %406 = vmatpush1.msra.mxu0 0.0
    %407 = vmatprep.subr.mxu0 0.0
    %408 = vmatpush1.msra.mxu0 0.0
    %409 = vmatprep.subr.mxu0 0.0
    %410 = vmatpush1.msra.mxu0 0.0
    %411 = vmatprep.subr.mxu0 0.0
    %412 = vmatpush1.msra.mxu0 0.0
    %413 = vmatprep.mubr.f32.mxu0 0.0
    %414 = vmatmul.mubr.f32.gmra.mrb[0].mxu0 %v347
    %v415 = vpop.f32.mrb[0].mxu0
    %v416 = vadd.f32 %v343, %v415
    %v417 = vpop.f32.mrb[0].mxu0
    %418 = vdwg.mxu0
    %v419 = vmax.f32 %v416, 0.0
    %v420 = vsel %vm119, %v419, %v232
    %v421 = vld [vmem:[#allocation2 + $0x58] sm:$0xff]
    %v422 = vld [vmem:[#allocation2 + $0x60] sm:$0xff]
    %v423 = vld [vmem:[#allocation2 + $0x68] sm:$0xff]
    %v424 = vld [vmem:[#allocation2 + $0x70] sm:$0xff]
    %v425 = vld [vmem:[#allocation2 + $0x78] sm:$0xff]
    %v426 = vld [vmem:[#allocation2 + $0x80] sm:$0xff]
    %v427 = vld [vmem:[#allocation2 + $0x88] sm:$0xff]
    %v428 = vld [vmem:[#allocation2 + $0x90] sm:$0xff]
    %v429 = vld [vmem:[#allocation2 + $0x98] sm:$0x1]
    %v430 = vlaneseq
    %v431 = vshrl.u32 %v430, 7
    %v432 = vsub.s32 0, %v431
    %v433 = vrot.slane %v429, %v432
    %v435 = vsel %vm134, %v420, 0
    %437 = vmatprep.subr.mxu0 0.0
    %438 = vmatpush1.msra.mxu0 %v421
    %439 = vmatprep.subr.mxu0 0.0
    %440 = vmatpush1.msra.mxu0 %v422
    %441 = vmatprep.subr.mxu0 0.0
    %442 = vmatpush1.msra.mxu0 %v423
    %443 = vmatprep.subr.mxu0 0.0
    %444 = vmatpush1.msra.mxu0 %v424
    %445 = vmatprep.subr.mxu0 0.0
    %446 = vmatpush1.msra.mxu0 %v425
    %447 = vmatprep.subr.mxu0 0.0
    %448 = vmatpush1.msra.mxu0 %v426
    %449 = vmatprep.subr.mxu0 0.0
    %450 = vmatpush1.msra.mxu0 %v427
    %451 = vmatprep.subr.mxu0 0.0
    %452 = vmatpush1.msra.mxu0 %v428
    %453 = vmatprep.subr.mxu0 0.0
    %454 = vmatpush1.msra.mxu0 0.0
    %455 = vmatprep.subr.mxu0 0.0
    %456 = vmatpush1.msra.mxu0 0.0
    %457 = vmatprep.subr.mxu0 0.0
    %458 = vmatpush1.msra.mxu0 0.0
    %459 = vmatprep.subr.mxu0 0.0
    %460 = vmatpush1.msra.mxu0 0.0
    %461 = vmatprep.subr.mxu0 0.0
    %462 = vmatpush1.msra.mxu0 0.0
    %463 = vmatprep.subr.mxu0 0.0
    %464 = vmatpush1.msra.mxu0 0.0
    %465 = vmatprep.subr.mxu0 0.0
    %466 = vmatpush1.msra.mxu0 0.0
    %467 = vmatprep.subr.mxu0 0.0
    %468 = vmatpush1.msra.mxu0 0.0
    %469 = vmatprep.subr.mxu0 0.0
    %470 = vmatpush1.msra.mxu0 0.0
    %471 = vmatprep.subr.mxu0 0.0
    %472 = vmatpush1.msra.mxu0 0.0
    %473 = vmatprep.subr.mxu0 0.0
    %474 = vmatpush1.msra.mxu0 0.0
    %475 = vmatprep.subr.mxu0 0.0
    %476 = vmatpush1.msra.mxu0 0.0
    %477 = vmatprep.subr.mxu0 0.0
    %478 = vmatpush1.msra.mxu0 0.0
    %479 = vmatprep.subr.mxu0 0.0
    %480 = vmatpush1.msra.mxu0 0.0
    %481 = vmatprep.subr.mxu0 0.0
    %482 = vmatpush1.msra.mxu0 0.0
    %483 = vmatprep.subr.mxu0 0.0
    %484 = vmatpush1.msra.mxu0 0.0
    %485 = vmatprep.subr.mxu0 0.0
    %486 = vmatpush1.msra.mxu0 0.0
    %487 = vmatprep.subr.mxu0 0.0
    %488 = vmatpush1.msra.mxu0 0.0
    %489 = vmatprep.subr.mxu0 0.0
    %490 = vmatpush1.msra.mxu0 0.0
    %491 = vmatprep.subr.mxu0 0.0
    %492 = vmatpush1.msra.mxu0 0.0
    %493 = vmatprep.subr.mxu0 0.0
    %494 = vmatpush1.msra.mxu0 0.0
    %495 = vmatprep.subr.mxu0 0.0
    %496 = vmatpush1.msra.mxu0 0.0
    %497 = vmatprep.subr.mxu0 0.0
    %498 = vmatpush1.msra.mxu0 0.0
    %499 = vmatprep.subr.mxu0 0.0
    %500 = vmatpush1.msra.mxu0 0.0
    %501 = vmatprep.mubr.f32.mxu0 0.0
    %502 = vmatmul.mubr.f32.gmra.mrb[0].mxu0 %v435
    %v503 = vpop.f32.mrb[0].mxu0
    %v504 = vadd.f32 %v433, %v503
    %v505 = vpop.f32.mrb[0].mxu0
    %506 = vdwg.mxu0
    %v507 = vxor.u32 %v504, 2147483648
    %v508 = vmul.f32 %v507, 1.442695
    %v509 = vpow.pop %v508
    %v510 = vadd.f32 %v509, 1.0
    %v511 = vrcp.pop %v510
    %v512 = vmul.f32 1.0, %v511
    %514 = vrot.lane.b32.xlu0 %v504, 32
    %v515 = vpop.permute.xlu0 %514
    %v517 = vmul.f32 %v512, %v515
    %519 = vrot.lane.b32.xlu0 %v517, 64
    %v520 = vpop.permute.xlu0 %519
    %v522 = vadd.f32 %v504, %v520
    %v523 = vtanh.pop %v522
    %v524 = vsub.f32 1.0, %v512
    %526 = vrot.lane.b32.xlu0 %v523, 96
    %v527 = vpop.permute.xlu0 %526
    %v529 = vmul.f32 %v524, %v527
    %v530 = vmul.f32 %v512, %v232
    %v531 = vadd.f32 %v529, %v530
    %v532 = vld [vmem:[#allocation2 + $0xf0] sm:$0xff]
    %v533 = vld [vmem:[#allocation2 + $0xf8] sm:$0xff]
    %v534 = vld [vmem:[#allocation2 + $0x100] sm:$0xff]
    %v535 = vld [vmem:[#allocation2 + $0x108] sm:$0xff]
    %v536 = vld [vmem:[#allocation2 + $0x110] sm:$0x1]
    %v537 = vlaneseq
    %v538 = vshrl.u32 %v537, 7
    %v539 = vsub.s32 0, %v538
    %v540 = vrot.slane %v536, %v539
    %542 = vrot.lane.b32.xlu0 %v531, 96
    %v543 = vpop.permute.xlu0 %542
    %v544 = vsel %vm119, %v543, 0
    %546 = vmatprep.subr.mxu0 0.0
    %547 = vmatpush1.msra.mxu0 %v532
    %548 = vmatprep.subr.mxu0 0.0
    %549 = vmatpush1.msra.mxu0 %v533
    %550 = vmatprep.subr.mxu0 0.0
    %551 = vmatpush1.msra.mxu0 %v534
    %552 = vmatprep.subr.mxu0 0.0
    %553 = vmatpush1.msra.mxu0 %v535
    %554 = vmatprep.subr.mxu0 0.0
    %555 = vmatpush1.msra.mxu0 0.0
    %556 = vmatprep.subr.mxu0 0.0
    %557 = vmatpush1.msra.mxu0 0.0
    %558 = vmatprep.subr.mxu0 0.0
    %559 = vmatpush1.msra.mxu0 0.0
    %560 = vmatprep.subr.mxu0 0.0
    %561 = vmatpush1.msra.mxu0 0.0
    %562 = vmatprep.subr.mxu0 0.0
    %563 = vmatpush1.msra.mxu0 0.0
    %564 = vmatprep.subr.mxu0 0.0
    %565 = vmatpush1.msra.mxu0 0.0
    %566 = vmatprep.subr.mxu0 0.0
    %567 = vmatpush1.msra.mxu0 0.0
    %568 = vmatprep.subr.mxu0 0.0
    %569 = vmatpush1.msra.mxu0 0.0
    %570 = vmatprep.subr.mxu0 0.0
    %571 = vmatpush1.msra.mxu0 0.0
    %572 = vmatprep.subr.mxu0 0.0
    %573 = vmatpush1.msra.mxu0 0.0
    %574 = vmatprep.subr.mxu0 0.0
    %575 = vmatpush1.msra.mxu0 0.0
    %576 = vmatprep.subr.mxu0 0.0
    %577 = vmatpush1.msra.mxu0 0.0
    %578 = vmatprep.subr.mxu0 0.0
    %579 = vmatpush1.msra.mxu0 0.0
    %580 = vmatprep.subr.mxu0 0.0
    %581 = vmatpush1.msra.mxu0 0.0
    %582 = vmatprep.subr.mxu0 0.0
    %583 = vmatpush1.msra.mxu0 0.0
    %584 = vmatprep.subr.mxu0 0.0
    %585 = vmatpush1.msra.mxu0 0.0
    %586 = vmatprep.subr.mxu0 0.0
    %587 = vmatpush1.msra.mxu0 0.0
    %588 = vmatprep.subr.mxu0 0.0
    %589 = vmatpush1.msra.mxu0 0.0
    %590 = vmatprep.subr.mxu0 0.0
    %591 = vmatpush1.msra.mxu0 0.0
    %592 = vmatprep.subr.mxu0 0.0
    %593 = vmatpush1.msra.mxu0 0.0
    %594 = vmatprep.subr.mxu0 0.0
    %595 = vmatpush1.msra.mxu0 0.0
    %596 = vmatprep.subr.mxu0 0.0
    %597 = vmatpush1.msra.mxu0 0.0
    %598 = vmatprep.subr.mxu0 0.0
    %599 = vmatpush1.msra.mxu0 0.0
    %600 = vmatprep.subr.mxu0 0.0
    %601 = vmatpush1.msra.mxu0 0.0
    %602 = vmatprep.subr.mxu0 0.0
    %603 = vmatpush1.msra.mxu0 0.0
    %604 = vmatprep.subr.mxu0 0.0
    %605 = vmatpush1.msra.mxu0 0.0
    %606 = vmatprep.subr.mxu0 0.0
    %607 = vmatpush1.msra.mxu0 0.0
    %608 = vmatprep.subr.mxu0 0.0
    %609 = vmatpush1.msra.mxu0 0.0
    %610 = vmatprep.mubr.f32.mxu0 0.0
    %611 = vmatmul.mubr.f32.gmra.mrb[0].mxu0 %v544
    %v612 = vpop.f32.mrb[0].mxu0
    %v613 = vadd.f32 %v540, %v612
    %v614 = vpop.f32.mrb[0].mxu0
    %615 = vdwg.mxu0
    %vm616 = vcmp.lt.s32.totalorder %v30, 10
    %v617 = vsel %vm616, %v613, -1e+30
    %618 = vmax.xlane.f32.xlu0 %v617
    %v619 = vpop.xlane.xlu0 %618
    %v620 = vsub.f32 %v617, %v619
    %v621 = vmul.f32 %v620, 1.442695
    %v622 = vpow.pop %v621
    %v623 = vsel %vm616, %v622, 0.0
    %624 = vadd.xlane.f32.xlu0 %v623
    %v625 = vpop.xlane.xlu0 %624
    %v626 = vlog2.pop %v625
    %v627 = vmul.f32 %v626, 0.6931472
    %v628 = vadd.f32 %v627, %v619
    %v629 = vsub.f32 %v613, %v628
    %630 = vst [vmem:[#allocation5] sm:$0xff] %v629
    // Predicated region
    $region18: #{nmt_forward.1} parent=1 // pred_check
      _
    $region19: #{nmt_forward.1} parent=1 // pred_check_branch
      %632 = sbr.rel (0) target = $region21
    $region20: #{nmt_forward.1} parent=1 // pred_region
      %s634 = ssub.s32 128, 128
      %635 = vsyncadd [#allocation4], %s634
      %s637 = sshll.u32 [#allocation5], 4
      %s638 = int_to_ptr.vmem [resolvable:$true] %s637
      %640 = dma.vmem_to_hbm [thread:$0]  %s638, 128, %s3, [#allocation4]
    $region21: #{nmt_forward.1} parent=1 // pred_fallthru
      _
    // Predicated region
    $region22: #{nmt_forward.1} parent=1 // pred_check
      _
    $region23: #{nmt_forward.1} parent=1 // pred_check_branch
      %642 = sbr.rel (0) target = $region25
    $region24: #{nmt_forward.1} parent=1 // pred_region
      %643 = dma.done [#allocation4], 128
    $region25: #{nmt_forward.1} parent=1 // pred_fallthru
      _
    %644 = vsyncpa [#allocation3], 1
    %645 = vsyncpa [#allocation4], 1

</llo_original>
